<compile_context>
chip_gen: v7x
topology: tpu7x:2x2x1
jax: 0.10.0
libtpu: 0.0.40
codegen_flags: <defaults>
</compile_context>

<pallas_src>
import jax
import jax.numpy as jnp
import numpy as np
from jax.experimental import pallas as pl
from jax.experimental.pallas import tpu as pltpu

H1 = 10    # fc1 out_features
KF = 51    # fc1 in_features (H * C must equal 51)


def nin_acoustic_kernel(x_ref, w1_ref, b1_ref, w2_ref, b2_ref, o_ref):
    # x_ref : (TB, C*H*W)   TB flattened NCHW batch rows (one contiguous DMA)
    # w1_ref: (C*H*W, H1*W) block-structured fc1 weight (permute folded in)
    # b1_ref: (1, H1*W)     fc1 bias, repeated per time-step
    # w2_ref: (H1*W, W)     block-structured fc2 weight
    # b2_ref: (1, 1)        fc2 scalar bias in SMEM
    # o_ref : (TB, W)       per-row softmax over the W (time-step) axis
    h = jnp.dot(x_ref[...], w1_ref[...], preferred_element_type=jnp.float32)
    h = h + b1_ref[...]                                   # fc1 bias
    h = pl.reciprocal(1.0 + jnp.exp(-h), approx=False)    # sigmoid (exp on EUP)

    z = jnp.dot(h, w2_ref[...], preferred_element_type=jnp.float32) + b2_ref[0, 0]

    # Numerically-stable softmax along the W axis.
    m = jnp.max(z, axis=1, keepdims=True)
    e = jnp.exp(z - m)
    s = jnp.sum(e, axis=1, keepdims=True)
    o_ref[...] = e * pl.reciprocal(s, approx=False)


def _fold_weights(w1, b1, w2, C, H, W):
    """Fold torch's permute(0,3,2,1) feature ordering into block-structured weights.

    Feature order after permute+reshape is h-major / c-minor: k = h*C + c.
    These einsums are pure outer products with an identity (no contraction),
    so every entry is bitwise a copy of the original weight or exactly 0.
    """
    eye_w = jnp.eye(W, dtype=w1.dtype)
    w1_hc = w1.reshape(H1, H, C)                                    # [o, h, c]
    # W1big[c*H*W + h*W + w, o*W + v] = w1[o, h*C + c] * delta(w, v)
    w1_big = jnp.einsum('ohc,wv->chwov', w1_hc, eye_w).reshape(C * H * W, H1 * W)
    # b1big[o*W + v] = b1[o]
    b1_big = jnp.repeat(b1, W).reshape(1, H1 * W)
    # W2big[o*W + w, v] = w2[o] * delta(w, v)
    w2_big = jnp.einsum('o,wv->owv', w2.reshape(H1), eye_w).reshape(H1 * W, W)
    return w1_big, b1_big, w2_big


def nin_weights_acoustic(x_nchw, w1, b1, w2, b2, *, tb_max=1024):
    """x_nchw: (B, C, H, W) float32 with H*C == 51.  Returns (B, W) softmax weights."""
    B, C, H, W = x_nchw.shape
    assert H * C == KF, "fc1 expects 51 input features (H*C == 51)"
    k_in = C * H * W

    w1_big, b1_big, w2_big = _fold_weights(w1, b1, w2, C, H, W)
    b2_s = b2.reshape(1, 1)

    # Only a FREE reshape of the contiguous NCHW input -- x touches HBM once.
    x_flat = x_nchw.reshape(B, k_in)

    tb = min(tb_max, B)                      # rows per grid step
    n_blk = (B + tb - 1) // tb
    b_pad = n_blk * tb
    if b_pad != B:                           # pad batch to a multiple of tb
        x_flat = jnp.pad(x_flat, ((0, b_pad - B), (0, 0)))

    out = pl.pallas_call(
        nin_acoustic_kernel,
        out_shape=jax.ShapeDtypeStruct((b_pad, W), jnp.float32),
        grid=(n_blk,),
        in_specs=[
            pl.BlockSpec((tb, k_in), lambda i: (i, 0)),           # x: TB rows / step
            pl.BlockSpec((k_in, H1 * W), lambda i: (0, 0)),       # W1big (VMEM-resident)
            pl.BlockSpec((1, H1 * W), lambda i: (0, 0)),          # b1big
            pl.BlockSpec((H1 * W, W), lambda i: (0, 0)),          # W2big
            pl.BlockSpec(memory_space=pltpu.MemorySpace.SMEM),    # b2 scalar
        ],
        out_specs=pl.BlockSpec((tb, W), lambda i: (i, 0)),
        compiler_params=pltpu.CompilerParams(
            dimension_semantics=("parallel",)),                   # v7x dual-TC sharding
    )(x_flat, w1_big, b1_big, w2_big, b2_s)
    return out[:B]


def init_params(key):
    # Deterministic torch.nn.Linear-style init: U(-1/sqrt(fan_in), 1/sqrt(fan_in))
    k1, k2, k3, k4 = jax.random.split(key, 4)
    bound1 = 1.0 / np.sqrt(KF)
    w1 = jax.random.uniform(k1, (H1, KF), jnp.float32, -bound1, bound1)
    b1 = jax.random.uniform(k2, (H1,), jnp.float32, -bound1, bound1)
    bound2 = 1.0 / np.sqrt(H1)
    w2 = jax.random.uniform(k3, (1, H1), jnp.float32, -bound2, bound2)
    b2 = jax.random.uniform(k4, (1,), jnp.float32, -bound2, bound2)
    return w1, b1, w2, b2


def reference(x_nchw, w1, b1, w2, b2):
    # Pure-JAX mirror of the torch forward (full f32 matmuls for the 1e-5 check).
    B = x_nchw.shape[0]
    Wt = x_nchw.shape[3]
    x = jnp.transpose(x_nchw, (0, 3, 2, 1)).reshape(B * Wt, -1)
    h = jax.nn.sigmoid(jnp.dot(x, w1.T, precision='highest') + b1)
    y = (jnp.dot(h, w2.T, precision='highest') + b2).reshape(B, -1)
    return jax.nn.softmax(y, axis=1)


if __name__ == "__main__":
    key = jax.random.PRNGKey(0)
    kx, kp, kx2 = jax.random.split(key, 3)
    B, C, H, W = 2, 3, 17, 8          # H * C = 51 = fc1 in_features
    x = jax.random.normal(kx, (B, C, H, W), jnp.float32)
    w1, b1, w2, b2 = init_params(kp)

    out = jax.block_until_ready(nin_weights_acoustic(x, w1, b1, w2, b2))
    ref = reference(x, w1, b1, w2, b2)
    np.testing.assert_allclose(np.asarray(out), np.asarray(ref), rtol=1e-5, atol=1e-5)

    # Exercise the multi-block / batch-padding path (B=20, TB=8 -> grid of 3).
    x2 = jax.random.normal(kx2, (20, C, H, W), jnp.float32)
    out2 = jax.block_until_ready(nin_weights_acoustic(x2, w1, b1, w2, b2, tb_max=8))
    ref2 = reference(x2, w1, b1, w2, b2)
    np.testing.assert_allclose(np.asarray(out2), np.asarray(ref2), rtol=1e-5, atol=1e-5)

    print("KERNEL_OK")
</pallas_src>

<mosaic_0001>
module attributes {stable_mosaic.version = 11 : i64} {
  func.func @nin_acoustic_kernel(%arg0: i32, %arg1: memref<2x408xf32, #tpu.memory_space<vmem>>, %arg2: memref<408x80xf32, #tpu.memory_space<vmem>>, %arg3: memref<1x80xf32, #tpu.memory_space<vmem>>, %arg4: memref<80x8xf32, #tpu.memory_space<vmem>>, %arg5: memref<1x1xf32, #tpu.memory_space<smem>>, %arg6: memref<2x8xf32, #tpu.memory_space<vmem>>) attributes {dimension_semantics = [#tpu.dimension_semantics<parallel>], iteration_bounds = array<i64: 1>, scalar_prefetch = 0 : i64, scratch_operands = 0 : i64, tpu.core_type = #tpu.core_type<tc>, window_params = [{transform_indices = @transform_0, window_bounds = array<i64: 2, 408>}, {pipeline_mode = #tpu.pipeline_mode<synchronous>, transform_indices = @transform_1, window_bounds = array<i64: 408, 80>}, {pipeline_mode = #tpu.pipeline_mode<synchronous>, transform_indices = @transform_2, window_bounds = array<i64: 1, 80>}, {pipeline_mode = #tpu.pipeline_mode<synchronous>, transform_indices = @transform_3, window_bounds = array<i64: 80, 8>}, {transform_indices = @transform_4, window_bounds = array<i64: 1, 1>}, {transform_indices = @transform_5, window_bounds = array<i64: 2, 8>}]} {
    %c0 = arith.constant 0 : index
    %c0_0 = arith.constant 0 : index
    %0 = vector.load %arg1[%c0, %c0_0] : memref<2x408xf32, #tpu.memory_space<vmem>>, vector<2x408xf32>
    %c0_1 = arith.constant 0 : index
    %c0_2 = arith.constant 0 : index
    %1 = vector.load %arg2[%c0_1, %c0_2] : memref<408x80xf32, #tpu.memory_space<vmem>>, vector<408x80xf32>
    %cst = arith.constant dense<0.000000e+00> : vector<2x80xf32>
    %2 = tpu.matmul %0, %1, %cst {dimension_numbers = #tpu.dot_dimension_numbers<[1], [0], [0], [1], [0, 0, 1, 1], [], []>} : vector<2x408xf32>, vector<408x80xf32>, vector<2x80xf32> -> vector<2x80xf32>
    %c0_3 = arith.constant 0 : index
    %c0_4 = arith.constant 0 : index
    %3 = vector.load %arg3[%c0_3, %c0_4] : memref<1x80xf32, #tpu.memory_space<vmem>>, vector<1x80xf32>
    %4 = vector.broadcast %3 : vector<1x80xf32> to vector<2x80xf32>
    %5 = arith.addf %2, %4 : vector<2x80xf32>
    %cst_5 = arith.constant 0.000000e+00 : f32
    %6 = vector.broadcast %cst_5 : f32 to vector<2x80xf32>
    %7 = arith.subf %6, %5 : vector<2x80xf32>
    %8 = math.exp %7 : vector<2x80xf32>
    %cst_6 = arith.constant 1.000000e+00 : f32
    %9 = vector.broadcast %cst_6 : f32 to vector<2x80xf32>
    %10 = arith.addf %9, %8 : vector<2x80xf32>
    %11 = tpu.reciprocal %10 : vector<2x80xf32> -> vector<2x80xf32>
    %c0_7 = arith.constant 0 : index
    %c0_8 = arith.constant 0 : index
    %12 = vector.load %arg4[%c0_7, %c0_8] : memref<80x8xf32, #tpu.memory_space<vmem>>, vector<80x8xf32>
    %cst_9 = arith.constant dense<0.000000e+00> : vector<2x8xf32>
    %13 = tpu.matmul %11, %12, %cst_9 {dimension_numbers = #tpu.dot_dimension_numbers<[1], [0], [0], [1], [0, 0, 1, 1], [], []>} : vector<2x80xf32>, vector<80x8xf32>, vector<2x8xf32> -> vector<2x8xf32>
    %c0_10 = arith.constant 0 : index
    %c0_11 = arith.constant 0 : index
    %14 = memref.load %arg5[%c0_10, %c0_11] : memref<1x1xf32, #tpu.memory_space<smem>>
    %15 = vector.broadcast %14 : f32 to vector<2x8xf32>
    %16 = arith.addf %13, %15 : vector<2x8xf32>
    %cst_12 = arith.constant dense<0xFF800000> : vector<2xf32>
    %17 = vector.multi_reduction <maximumf>, %16, %cst_12 [1] : vector<2x8xf32> to vector<2xf32>
    %18 = vector.shape_cast %17 : vector<2xf32> to vector<2x1xf32>
    %19 = vector.broadcast %18 : vector<2x1xf32> to vector<2x8xf32>
    %20 = arith.subf %16, %19 : vector<2x8xf32>
    %21 = math.exp %20 : vector<2x8xf32>
    %cst_13 = arith.constant dense<0.000000e+00> : vector<2xf32>
    %22 = vector.multi_reduction <add>, %21, %cst_13 [1] : vector<2x8xf32> to vector<2xf32>
    %23 = vector.shape_cast %22 : vector<2xf32> to vector<2x1xf32>
    %24 = tpu.reciprocal %23 : vector<2x1xf32> -> vector<2x1xf32>
    %25 = vector.broadcast %24 : vector<2x1xf32> to vector<2x8xf32>
    %26 = arith.mulf %21, %25 : vector<2x8xf32>
    %c0_14 = arith.constant 0 : index
    %c0_15 = arith.constant 0 : index
    %27 = vector.load %arg6[%c0_14, %c0_15] : memref<2x8xf32, #tpu.memory_space<vmem>>, vector<2x8xf32>
    tpu.vector_store %arg6[%c0_14, %c0_15], %26 {strides = array<i32>} : memref<2x8xf32, #tpu.memory_space<vmem>>, vector<2x8xf32>,
    return
  }
  func.func @transform_0(%arg0: i32) -> (i32, i32) {
    %c0_i32 = arith.constant 0 : i32
    %c0_i32_0 = arith.constant 0 : i32
    return %arg0, %c0_i32 : i32, i32
  }
  func.func @transform_1(%arg0: i32) -> (i32, i32) {
    %c0_i32 = arith.constant 0 : i32
    %c0_i32_0 = arith.constant 0 : i32
    %c0_i32_1 = arith.constant 0 : i32
    return %c0_i32, %c0_i32_0 : i32, i32
  }
  func.func @transform_2(%arg0: i32) -> (i32, i32) {
    %c0_i32 = arith.constant 0 : i32
    %c0_i32_0 = arith.constant 0 : i32
    %c0_i32_1 = arith.constant 0 : i32
    return %c0_i32, %c0_i32_0 : i32, i32
  }
  func.func @transform_3(%arg0: i32) -> (i32, i32) {
    %c0_i32 = arith.constant 0 : i32
    %c0_i32_0 = arith.constant 0 : i32
    %c0_i32_1 = arith.constant 0 : i32
    return %c0_i32, %c0_i32_0 : i32, i32
  }
  func.func @transform_4(%arg0: i32) -> (i32, i32) {
    %c0_i32 = arith.constant 0 : i32
    %c0_i32_0 = arith.constant 0 : i32
    %c0_i32_1 = arith.constant 0 : i32
    return %c0_i32, %c0_i32_0 : i32, i32
  }
  func.func @transform_5(%arg0: i32) -> (i32, i32) {
    %c0_i32 = arith.constant 0 : i32
    %c0_i32_0 = arith.constant 0 : i32
    return %arg0, %c0_i32 : i32, i32
  }
}

</mosaic_0001>

<llo_original>
// kernel: tpu_custom_call.1
$region0: #{tpu_custom_call.1}
  #allocation0 [shape = 'u32[]', space=smem, size = 0x4, offset = 0x4, fixed_abs, tag = 'smem constant byte address 0x4 - core index']
  #allocation1 [shape = 'u32[144,128]{1,0:T(1,128)}', space=vmem, size = 0x12000, scoped, tag = 'internal scratch']
  #allocation2 [shape = 'f32[1,1]{1,0:T(1,128)S(6)}', space=smem, size = 0x200, scoped, tag = 'scoped memory for tpu_custom_call.1']
  %s0 = inlined_call_operand.vmem [shape: f32[2,408], index: 0, kind: input, shape index: {}]
  %s1 = inlined_call_operand.vmem [shape: f32[408,80], index: 1, kind: input, shape index: {}]
  %s2 = inlined_call_operand.vmem [shape: f32[1,80], index: 2, kind: input, shape index: {}]
  %s3 = inlined_call_operand.vmem [shape: f32[80,8], index: 3, kind: input, shape index: {}]
  %s4 = inlined_call_operand.<no memory space> [shape: f32[1,1], index: 4, kind: input, shape index: {}]
  %s5 = inlined_call_operand.hbm [shape: f32[2,8], index: 5, kind: output, shape index: {}]
  %s6 = sld [smem:[#allocation0]]
  $region30: #{tpu_custom_call.1} parent=0
    _
  %s8 = ssub.s32 1, %s6
  %s9 = scalar_select 0, %s8, %s6
  %10 = sst [smem:[#allocation2]] %s4
  $region1: #{tpu_custom_call.1} parent=0
    #allocation3 [shape = 'u8[1024]{0}', space=vmem, size = 0x400, scoped, tag = 'output window, operand 0, single buffered']
    #allocation4 [shape = 's32[1]{0}', space=sflag, size = 0x4, scoped, tag = 'scoped memory for tpu_custom_call.1']
    %11 = vsyncpa [#allocation4], 0
    // Predicated region
    $region2: #{tpu_custom_call.1} parent=1 // pred_check
      _
    $region3: #{tpu_custom_call.1} parent=1 // pred_check_branch
      %13 = sbr.rel (0) target = $region5
    $region4: #{tpu_custom_call.1} parent=1 // pred_region
      _
    $region5: #{tpu_custom_call.1} parent=1 // pred_fallthru
      _
    // Predicated region
    $region6: #{tpu_custom_call.1} parent=1 // pred_check
      _
    $region7: #{tpu_custom_call.1} parent=1 // pred_check_branch
      %15 = sbr.rel (0) target = $region9
    $region8: #{tpu_custom_call.1} parent=1 // pred_region
      _
    $region9: #{tpu_custom_call.1} parent=1 // pred_fallthru
      _
    // Predicated region
    $region10: #{tpu_custom_call.1} parent=1 // pred_check
      _
    $region11: #{tpu_custom_call.1} parent=1 // pred_check_branch
      %17 = sbr.rel (0) target = $region13
    $region12: #{tpu_custom_call.1} parent=1 // pred_region
      _
    $region13: #{tpu_custom_call.1} parent=1 // pred_fallthru
      _
    // Predicated region
    $region14: #{tpu_custom_call.1} parent=1 // pred_check
      _
    $region15: #{tpu_custom_call.1} parent=1 // pred_check_branch
      %19 = sbr.rel (0) target = $region17
    $region16: #{tpu_custom_call.1} parent=1 // pred_region
      _
    $region17: #{tpu_custom_call.1} parent=1 // pred_fallthru
      _
    // Predicated region
    $region18: #{tpu_custom_call.1} parent=1 // pred_check
      _
    $region19: #{tpu_custom_call.1} parent=1 // pred_check_branch
      %21 = sbr.rel (0) target = $region21
    $region20: #{tpu_custom_call.1} parent=1 // pred_region
      _
    $region21: #{tpu_custom_call.1} parent=1 // pred_fallthru
      _
    %v22 = vld [vmem:[%s0] sm:$0xff]
    %v23 = vld [vmem:[%s1] sm:$0xff]
    %v24 = vld [vmem:[%s1 + $0x8] sm:$0xff]
    %v25 = vld [vmem:[%s1 + $0x10] sm:$0xff]
    %v26 = vld [vmem:[%s1 + $0x18] sm:$0xff]
    %v27 = vld [vmem:[%s1 + $0x20] sm:$0xff]
    %v28 = vld [vmem:[%s1 + $0x28] sm:$0xff]
    %v29 = vld [vmem:[%s1 + $0x30] sm:$0xff]
    %v30 = vld [vmem:[%s1 + $0x38] sm:$0xff]
    %v31 = vld [vmem:[%s1 + $0x40] sm:$0xff]
    %v32 = vld [vmem:[%s1 + $0x48] sm:$0xff]
    %v33 = vld [vmem:[%s1 + $0x50] sm:$0xff]
    %v34 = vld [vmem:[%s1 + $0x58] sm:$0xff]
    %v35 = vld [vmem:[%s1 + $0x60] sm:$0xff]
    %v36 = vld [vmem:[%s1 + $0x68] sm:$0xff]
    %v37 = vld [vmem:[%s1 + $0x70] sm:$0xff]
    %v38 = vld [vmem:[%s1 + $0x78] sm:$0xff]
    %v39 = vld [vmem:[%s1 + $0x80] sm:$0xff]
    %v40 = vld [vmem:[%s1 + $0x88] sm:$0xff]
    %v41 = vld [vmem:[%s1 + $0x90] sm:$0xff]
    %v42 = vld [vmem:[%s1 + $0x98] sm:$0xff]
    %v43 = vld [vmem:[%s1 + $0xa0] sm:$0xff]
    %v44 = vld [vmem:[%s1 + $0xa8] sm:$0xff]
    %v45 = vld [vmem:[%s1 + $0xb0] sm:$0xff]
    %v46 = vld [vmem:[%s1 + $0xb8] sm:$0xff]
    %v47 = vld [vmem:[%s1 + $0xc0] sm:$0xff]
    %v48 = vld [vmem:[%s1 + $0xc8] sm:$0xff]
    %v49 = vld [vmem:[%s1 + $0xd0] sm:$0xff]
    %v50 = vld [vmem:[%s1 + $0xd8] sm:$0xff]
    %v51 = vld [vmem:[%s1 + $0xe0] sm:$0xff]
    %v52 = vld [vmem:[%s1 + $0xe8] sm:$0xff]
    %v53 = vld [vmem:[%s1 + $0xf0] sm:$0xff]
    %v54 = vld [vmem:[%s1 + $0xf8] sm:$0xff]
    %v55 = vld [vmem:[%s1 + $0x100] sm:$0xff]
    %v56 = vld [vmem:[%s1 + $0x108] sm:$0xff]
    %v57 = vld [vmem:[%s1 + $0x110] sm:$0xff]
    %v58 = vld [vmem:[%s1 + $0x118] sm:$0xff]
    %v59 = vld [vmem:[%s1 + $0x120] sm:$0xff]
    %v60 = vld [vmem:[%s1 + $0x128] sm:$0xff]
    %v61 = vld [vmem:[%s1 + $0x130] sm:$0xff]
    %v62 = vld [vmem:[%s1 + $0x138] sm:$0xff]
    %v63 = vld [vmem:[%s1 + $0x140] sm:$0xff]
    %v64 = vld [vmem:[%s1 + $0x148] sm:$0xff]
    %v65 = vld [vmem:[%s1 + $0x150] sm:$0xff]
    %v66 = vld [vmem:[%s1 + $0x158] sm:$0xff]
    %v67 = vld [vmem:[%s1 + $0x160] sm:$0xff]
    %v68 = vld [vmem:[%s1 + $0x168] sm:$0xff]
    %v69 = vld [vmem:[%s1 + $0x170] sm:$0xff]
    %v70 = vld [vmem:[%s1 + $0x178] sm:$0xff]
    %v71 = vld [vmem:[%s1 + $0x180] sm:$0xff]
    %v72 = vld [vmem:[%s1 + $0x188] sm:$0xff]
    %v73 = vld [vmem:[%s1 + $0x190] sm:$0xff]
    %v74 = vld [vmem:[%s2] sm:$0x1]
    %v76 = vlaneseq
    %v77 = vshrl.u32 %v76, 7
    %v78 = vsub.s32 0, %v77
    %v79 = vrot.slane %v74, %v78
    %v82 = vcombine.high %v22, %v22
    %v84 = vunpack.c.l.s4 1983009808
    %v85 = vunpack.c.0.s8 %v84
    %v86 = vlaneseq
    %v87 = vshrl.u32 %v86, 7
    %v88 = vsub.s32 %v85, %v87
    %v89 = vrot.slane %v22, %v88
    %v91 = vunpack.c.l.s4 1983009808
    %v92 = vunpack.c.0.s8 %v91
    %v93 = vlaneseq
    %v94 = vshrl.u32 %v93, 7
    %v95 = vsub.s32 %v92, %v94
    %v96 = vrot.slane %v82, %v95
    %v97 = vcombine.high %v89, %v89
    %v98 = vcombine.high %v96, %v96
    %vm102 = vcmask 195584
    %v103 = vsel %vm102, %v98, 0
    %105 = vmatprep.subr.mxu0 0.0
    %106 = vmatpush1.msra.mxu0 %v23
    %107 = vmatprep.subr.mxu0 0.0
    %108 = vmatpush1.msra.mxu0 %v24
    %109 = vmatprep.subr.mxu0 0.0
    %110 = vmatpush1.msra.mxu0 %v25
    %111 = vmatprep.subr.mxu0 0.0
    %112 = vmatpush1.msra.mxu0 %v26
    %113 = vmatprep.subr.mxu0 0.0
    %114 = vmatpush1.msra.mxu0 %v27
    %115 = vmatprep.subr.mxu0 0.0
    %116 = vmatpush1.msra.mxu0 %v28
    %117 = vmatprep.subr.mxu0 0.0
    %118 = vmatpush1.msra.mxu0 %v29
    %119 = vmatprep.subr.mxu0 0.0
    %120 = vmatpush1.msra.mxu0 %v30
    %121 = vmatprep.subr.mxu0 0.0
    %122 = vmatpush1.msra.mxu0 %v31
    %123 = vmatprep.subr.mxu0 0.0
    %124 = vmatpush1.msra.mxu0 %v32
    %125 = vmatprep.subr.mxu0 0.0
    %126 = vmatpush1.msra.mxu0 %v33
    %127 = vmatprep.subr.mxu0 0.0
    %128 = vmatpush1.msra.mxu0 %v34
    %129 = vmatprep.subr.mxu0 0.0
    %130 = vmatpush1.msra.mxu0 %v35
    %131 = vmatprep.subr.mxu0 0.0
    %132 = vmatpush1.msra.mxu0 %v36
    %133 = vmatprep.subr.mxu0 0.0
    %134 = vmatpush1.msra.mxu0 %v37
    %135 = vmatprep.subr.mxu0 0.0
    %136 = vmatpush1.msra.mxu0 %v38
    %137 = vmatprep.subr.mxu0 0.0
    %138 = vmatpush1.msra.mxu0 %v39
    %139 = vmatprep.subr.mxu0 0.0
    %140 = vmatpush1.msra.mxu0 %v40
    %141 = vmatprep.subr.mxu0 0.0
    %142 = vmatpush1.msra.mxu0 %v41
    %143 = vmatprep.subr.mxu0 0.0
    %144 = vmatpush1.msra.mxu0 %v42
    %145 = vmatprep.subr.mxu0 0.0
    %146 = vmatpush1.msra.mxu0 %v43
    %147 = vmatprep.subr.mxu0 0.0
    %148 = vmatpush1.msra.mxu0 %v44
    %149 = vmatprep.subr.mxu0 0.0
    %150 = vmatpush1.msra.mxu0 %v45
    %151 = vmatprep.subr.mxu0 0.0
    %152 = vmatpush1.msra.mxu0 %v46
    %153 = vmatprep.subr.mxu0 0.0
    %154 = vmatpush1.msra.mxu0 %v47
    %155 = vmatprep.subr.mxu0 0.0
    %156 = vmatpush1.msra.mxu0 %v48
    %157 = vmatprep.subr.mxu0 0.0
    %158 = vmatpush1.msra.mxu0 %v49
    %159 = vmatprep.subr.mxu0 0.0
    %160 = vmatpush1.msra.mxu0 %v50
    %161 = vmatprep.subr.mxu0 0.0
    %162 = vmatpush1.msra.mxu0 %v51
    %163 = vmatprep.subr.mxu0 0.0
    %164 = vmatpush1.msra.mxu0 %v52
    %165 = vmatprep.subr.mxu0 0.0
    %166 = vmatpush1.msra.mxu0 %v53
    %167 = vmatprep.subr.mxu0 0.0
    %168 = vmatpush1.msra.mxu0 %v54
    %169 = vmatprep.mubr.f32.mxu0 %v97
    %170 = vmatmul.mubr.f32.gmra.mrb[0].mxu0 %v89
    %v171 = vpop.f32.mrb[0].mxu0
    %v172 = vadd.f32 %v79, %v171
    %v173 = vpop.f32.mrb[0].mxu0
    %174 = vdwg.mxu0
    %175 = vmatprep.subr.mxu0 0.0
    %176 = vmatpush1.msra.mxu0 %v55
    %177 = vmatprep.subr.mxu0 0.0
    %178 = vmatpush1.msra.mxu0 %v56
    %179 = vmatprep.subr.mxu0 0.0
    %180 = vmatpush1.msra.mxu0 %v57
    %181 = vmatprep.subr.mxu0 0.0
    %182 = vmatpush1.msra.mxu0 %v58
    %183 = vmatprep.subr.mxu0 0.0
    %184 = vmatpush1.msra.mxu0 %v59
    %185 = vmatprep.subr.mxu0 0.0
    %186 = vmatpush1.msra.mxu0 %v60
    %187 = vmatprep.subr.mxu0 0.0
    %188 = vmatpush1.msra.mxu0 %v61
    %189 = vmatprep.subr.mxu0 0.0
    %190 = vmatpush1.msra.mxu0 %v62
    %191 = vmatprep.subr.mxu0 0.0
    %192 = vmatpush1.msra.mxu0 %v63
    %193 = vmatprep.subr.mxu0 0.0
    %194 = vmatpush1.msra.mxu0 %v64
    %195 = vmatprep.subr.mxu0 0.0
    %196 = vmatpush1.msra.mxu0 %v65
    %197 = vmatprep.subr.mxu0 0.0
    %198 = vmatpush1.msra.mxu0 %v66
    %199 = vmatprep.subr.mxu0 0.0
    %200 = vmatpush1.msra.mxu0 %v67
    %201 = vmatprep.subr.mxu0 0.0
    %202 = vmatpush1.msra.mxu0 %v68
    %203 = vmatprep.subr.mxu0 0.0
    %204 = vmatpush1.msra.mxu0 %v69
    %205 = vmatprep.subr.mxu0 0.0
    %206 = vmatpush1.msra.mxu0 %v70
    %207 = vmatprep.subr.mxu0 0.0
    %208 = vmatpush1.msra.mxu0 %v71
    %209 = vmatprep.subr.mxu0 0.0
    %210 = vmatpush1.msra.mxu0 %v72
    %211 = vmatprep.subr.mxu0 0.0
    %212 = vmatpush1.msra.mxu0 %v73
    %213 = vmatprep.subr.mxu0 0.0
    %214 = vmatpush1.msra.mxu0 0.0
    %215 = vmatprep.subr.mxu0 0.0
    %216 = vmatpush1.msra.mxu0 0.0
    %217 = vmatprep.subr.mxu0 0.0
    %218 = vmatpush1.msra.mxu0 0.0
    %219 = vmatprep.subr.mxu0 0.0
    %220 = vmatpush1.msra.mxu0 0.0
    %221 = vmatprep.subr.mxu0 0.0
    %222 = vmatpush1.msra.mxu0 0.0
    %223 = vmatprep.subr.mxu0 0.0
    %224 = vmatpush1.msra.mxu0 0.0
    %225 = vmatprep.subr.mxu0 0.0
    %226 = vmatpush1.msra.mxu0 0.0
    %227 = vmatprep.subr.mxu0 0.0
    %228 = vmatpush1.msra.mxu0 0.0
    %229 = vmatprep.subr.mxu0 0.0
    %230 = vmatpush1.msra.mxu0 0.0
    %231 = vmatprep.subr.mxu0 0.0
    %232 = vmatpush1.msra.mxu0 0.0
    %233 = vmatprep.subr.mxu0 0.0
    %234 = vmatpush1.msra.mxu0 0.0
    %235 = vmatprep.subr.mxu0 0.0
    %236 = vmatpush1.msra.mxu0 0.0
    %237 = vmatprep.subr.mxu0 0.0
    %238 = vmatpush1.msra.mxu0 0.0
    %239 = vmatprep.mubr.f32.mxu0 %v103
    %240 = vmatmul.mubr.f32.gmra.mrb[0].mxu0 %v96
    %v241 = vpop.f32.mrb[0].mxu0
    %v242 = vadd.f32 %v172, %v241
    %v243 = vpop.f32.mrb[0].mxu0
    %244 = vdwg.mxu0
    %v245 = vsub.f32 0.0, %v242
    %v246 = vmul.f32 %v245, 1.442695
    %v247 = vpow.pop %v246
    %v248 = vadd.f32 %v247, 1.0
    %v249 = vrcp.pop %v248
    %v250 = vld [vmem:[%s3] sm:$0xff]
    %v251 = vld [vmem:[%s3 + $0x8] sm:$0xff]
    %v252 = vld [vmem:[%s3 + $0x10] sm:$0xff]
    %v253 = vld [vmem:[%s3 + $0x18] sm:$0xff]
    %v254 = vld [vmem:[%s3 + $0x20] sm:$0xff]
    %v255 = vld [vmem:[%s3 + $0x28] sm:$0xff]
    %v256 = vld [vmem:[%s3 + $0x30] sm:$0xff]
    %v257 = vld [vmem:[%s3 + $0x38] sm:$0xff]
    %v258 = vld [vmem:[%s3 + $0x40] sm:$0xff]
    %v259 = vld [vmem:[%s3 + $0x48] sm:$0xff]
    %s260 = sld [smem:[#allocation2]]
    %v261 = vstv %s260
    %vm262 = vcmask 654336
    %v264 = vsel %vm262, %v249, 0
    %266 = vmatprep.subr.mxu0 0.0
    %267 = vmatpush1.msra.mxu0 %v250
    %268 = vmatprep.subr.mxu0 0.0
    %269 = vmatpush1.msra.mxu0 %v251
    %270 = vmatprep.subr.mxu0 0.0
    %271 = vmatpush1.msra.mxu0 %v252
    %272 = vmatprep.subr.mxu0 0.0
    %273 = vmatpush1.msra.mxu0 %v253
    %274 = vmatprep.subr.mxu0 0.0
    %275 = vmatpush1.msra.mxu0 %v254
    %276 = vmatprep.subr.mxu0 0.0
    %277 = vmatpush1.msra.mxu0 %v255
    %278 = vmatprep.subr.mxu0 0.0
    %279 = vmatpush1.msra.mxu0 %v256
    %280 = vmatprep.subr.mxu0 0.0
    %281 = vmatpush1.msra.mxu0 %v257
    %282 = vmatprep.subr.mxu0 0.0
    %283 = vmatpush1.msra.mxu0 %v258
    %284 = vmatprep.subr.mxu0 0.0
    %285 = vmatpush1.msra.mxu0 %v259
    %286 = vmatprep.subr.mxu0 0.0
    %287 = vmatpush1.msra.mxu0 0.0
    %288 = vmatprep.subr.mxu0 0.0
    %289 = vmatpush1.msra.mxu0 0.0
    %290 = vmatprep.subr.mxu0 0.0
    %291 = vmatpush1.msra.mxu0 0.0
    %292 = vmatprep.subr.mxu0 0.0
    %293 = vmatpush1.msra.mxu0 0.0
    %294 = vmatprep.subr.mxu0 0.0
    %295 = vmatpush1.msra.mxu0 0.0
    %296 = vmatprep.subr.mxu0 0.0
    %297 = vmatpush1.msra.mxu0 0.0
    %298 = vmatprep.subr.mxu0 0.0
    %299 = vmatpush1.msra.mxu0 0.0
    %300 = vmatprep.subr.mxu0 0.0
    %301 = vmatpush1.msra.mxu0 0.0
    %302 = vmatprep.subr.mxu0 0.0
    %303 = vmatpush1.msra.mxu0 0.0
    %304 = vmatprep.subr.mxu0 0.0
    %305 = vmatpush1.msra.mxu0 0.0
    %306 = vmatprep.subr.mxu0 0.0
    %307 = vmatpush1.msra.mxu0 0.0
    %308 = vmatprep.subr.mxu0 0.0
    %309 = vmatpush1.msra.mxu0 0.0
    %310 = vmatprep.subr.mxu0 0.0
    %311 = vmatpush1.msra.mxu0 0.0
    %312 = vmatprep.subr.mxu0 0.0
    %313 = vmatpush1.msra.mxu0 0.0
    %314 = vmatprep.subr.mxu0 0.0
    %315 = vmatpush1.msra.mxu0 0.0
    %316 = vmatprep.subr.mxu0 0.0
    %317 = vmatpush1.msra.mxu0 0.0
    %318 = vmatprep.subr.mxu0 0.0
    %319 = vmatpush1.msra.mxu0 0.0
    %320 = vmatprep.subr.mxu0 0.0
    %321 = vmatpush1.msra.mxu0 0.0
    %322 = vmatprep.subr.mxu0 0.0
    %323 = vmatpush1.msra.mxu0 0.0
    %324 = vmatprep.subr.mxu0 0.0
    %325 = vmatpush1.msra.mxu0 0.0
    %326 = vmatprep.subr.mxu0 0.0
    %327 = vmatpush1.msra.mxu0 0.0
    %328 = vmatprep.subr.mxu0 0.0
    %329 = vmatpush1.msra.mxu0 0.0
    %330 = vmatprep.mubr.f32.mxu0 0.0
    %331 = vmatmul.mubr.f32.gmra.mrb[0].mxu0 %v264
    %v332 = vpop.f32.mrb[0].mxu0
    %v333 = vadd.f32 %v261, %v332
    %v334 = vpop.f32.mrb[0].mxu0
    %335 = vdwg.mxu0
    %vm336 = vcmask 58368
    %v337 = vsel %vm336, %v333, -inf
    %338 = vmax.xlane.f32.xlu0 %v337
    %v339 = vpop.xlane.xlu0 %338
    %v340 = vsub.f32 %v333, %v339
    %v341 = vmul.f32 %v340, 1.442695
    %v342 = vpow.pop %v341
    %v343 = vsel %vm336, %v342, 0.0
    %344 = vadd.xlane.f32.xlu0 %v343
    %v345 = vpop.xlane.xlu0 %344
    %v346 = vrcp.pop %v345
    %v347 = vmul.f32 %v342, %v346
    %348 = vst.msk [vmem:[#allocation3] sm:$0x3] %vm336, %v347
    // Predicated region
    $region22: #{tpu_custom_call.1} parent=1 // pred_check
      _
    $region23: #{tpu_custom_call.1} parent=1 // pred_check_branch
      %350 = sbr.rel (0) target = $region25
    $region24: #{tpu_custom_call.1} parent=1 // pred_region
      %s352 = ssub.s32 32, 32
      %353 = vsyncadd [#allocation4], %s352
      %s355 = sshll.u32 [#allocation3], 4
      %s356 = int_to_ptr.vmem [resolvable:$true] %s355
      %358 = dma.vmem_to_hbm [thread:$0]  %s356, 32, %s5, [#allocation4]
    $region25: #{tpu_custom_call.1} parent=1 // pred_fallthru
      _
    // Predicated region
    $region26: #{tpu_custom_call.1} parent=1 // pred_check
      _
    $region27: #{tpu_custom_call.1} parent=1 // pred_check_branch
      %360 = sbr.rel (0) target = $region29
    $region28: #{tpu_custom_call.1} parent=1 // pred_region
      %361 = dma.done [#allocation4], 32
    $region29: #{tpu_custom_call.1} parent=1 // pred_fallthru
      _
    %362 = vsyncpa [#allocation4], 1

</llo_original>
